<compile_context>
chip_gen: v7x
topology: tpu7x:2x2x1
jax: 0.10.0
libtpu: 0.0.40
codegen_flags: <defaults>
</compile_context>

<pallas_src>
import functools

import jax
import jax.numpy as jnp
from jax.experimental import pallas as pl
from jax.experimental.pallas import tpu as pltpu

_LANE = 128
_SUBLANE = 8


def _round_up(x, m):
    return (x + m - 1) // m * m


# ---------------------------------------------------------------------------
# Kernels
# ---------------------------------------------------------------------------
def _mlp_kernel_fused(x_ref, w0_ref, b0_ref, w1_ref, b1_ref, o_ref):
    """Single K-step path: w0 fully resident, no accumulator scratch."""
    x = x_ref[...]
    if x.dtype != jnp.bfloat16:                       # X.float() -> bf16 MXU operand
        x = x.astype(jnp.bfloat16)
    h = jnp.dot(x, w0_ref[...], preferred_element_type=jnp.float32)
    h = jnp.maximum(h + b0_ref[...], 0.0)             # bias + ReLU in f32 on the VPU
    y = jnp.dot(h.astype(jnp.bfloat16), w1_ref[...],
                preferred_element_type=jnp.float32)
    o_ref[...] = (y + b1_ref[...]).astype(o_ref.dtype)  # lane-dense (padded-C) store


def _mlp_kernel_ktiled(x_ref, w0_ref, b0_ref, w1_ref, b1_ref, o_ref, acc_ref):
    """K-tiled path, grid = (batch_tiles, k_tiles): only a (tk, Hp) slice of w0
    is live per step; an f32 VMEM accumulator carries first-layer partials."""
    k = pl.program_id(1)

    @pl.when(k == 0)
    def _():
        acc_ref[...] = jnp.zeros_like(acc_ref)

    x = x_ref[...]
    if x.dtype != jnp.bfloat16:
        x = x.astype(jnp.bfloat16)
    acc_ref[...] += jnp.dot(x, w0_ref[...], preferred_element_type=jnp.float32)

    @pl.when(k == pl.num_programs(1) - 1)
    def _():
        h = jnp.maximum(acc_ref[...] + b0_ref[...], 0.0)
        y = jnp.dot(h.astype(jnp.bfloat16), w1_ref[...],
                    preferred_element_type=jnp.float32)
        o_ref[...] = (y + b1_ref[...]).astype(o_ref.dtype)


# ---------------------------------------------------------------------------
# One-time parameter prep (outside the per-step forward)
# ---------------------------------------------------------------------------
def prepare_mlp_params(w0, b0, w1, b1):
    """PyTorch layout in:  w0 [H, D], b0 [H], w1 [C, H], b1 [C]
    Kernel layout out:  w0_t [D, Hp] bf16, b0_p [1, Hp] f32,
                        w1_t [Hp, Cp] bf16, b1_p [1, Cp] f32
    Hp, Cp zero-padded to multiples of 128 (padding propagates exact zeros
    through ReLU and the second matmul; padded output columns are sliced off).
    """
    H, D = w0.shape
    C = w1.shape[0]
    Hp = _round_up(H, _LANE)
    Cp = _round_up(C, _LANE)

    w0_t = jnp.zeros((D, Hp), jnp.bfloat16).at[:, :H].set(
        jnp.transpose(w0).astype(jnp.bfloat16))
    b0_p = jnp.zeros((1, Hp), jnp.float32).at[:, :H].set(b0.astype(jnp.float32))
    w1_t = jnp.zeros((Hp, Cp), jnp.bfloat16).at[:H, :C].set(
        jnp.transpose(w1).astype(jnp.bfloat16))
    b1_p = jnp.zeros((1, Cp), jnp.float32).at[:, :C].set(b1.astype(jnp.float32))
    return w0_t, b0_p, w1_t, b1_p


# ---------------------------------------------------------------------------
# Tiling / budgeting helpers
# ---------------------------------------------------------------------------
def _vmem_capacity_bytes():
    try:
        return int(pltpu.get_tpu_info().vmem_capacity_bytes)
    except Exception:
        return 64 * 1024 * 1024  # v7x per-TC VMEM: the most conservative default


def _choose_block_b(B, cap_rows=512):
    if B <= _SUBLANE:
        return B                                        # one full-extent tile
    # Guarantee >=2 grid steps once B >= 16 so both v7x TensorCores get work.
    cap = max(_SUBLANE, min(cap_rows, _round_up(pl.cdiv(B, 2), _SUBLANE)))
    if B % _SUBLANE == 0:
        # Largest multiple-of-8 divisor of B that fits the cap: no ragged tail.
        start = min(cap, B)
        start -= start % _SUBLANE
        for cand in range(start, 0, -_SUBLANE):
            if B % cand == 0:
                return cand
    return cap


def _choose_tk(D, Hp, Cp, weight_budget_bytes):
    """Keep w0 fully resident unless its bf16 footprint would crowd VMEM."""
    if D % _LANE != 0:
        return D
    if (D * Hp + Hp * Cp) * 2 <= weight_budget_bytes:
        return D
    for tk in (1024, 512, 256, 128):
        if D % tk == 0:
            return tk
    return D


# ---------------------------------------------------------------------------
# Forward
# ---------------------------------------------------------------------------
@functools.partial(
    jax.jit,
    static_argnames=("num_classes", "out_dtype", "block_b", "single_buffer_invariants"),
)
def _mlp_forward_impl(x, w0_t, b0_p, w1_t, b1_p, *, num_classes, out_dtype,
                      block_b, single_buffer_invariants):
    B, D = x.shape
    Hp = w0_t.shape[1]
    Cp = w1_t.shape[1]
    out_itemsize = jnp.dtype(out_dtype).itemsize

    vmem_cap = _vmem_capacity_bytes()
    vmem_budget = int(0.80 * vmem_cap)

    tk = _choose_tk(D, Hp, Cp, weight_budget_bytes=int(0.40 * vmem_cap))
    k_steps = pl.cdiv(D, tk)

    if block_b is None:
        block_b = _choose_block_b(B, cap_rows=512)

    def resident_bytes(bb):
        # Exact buffer depths: 2x only for the pipelined x/out tiles (and w0
        # slices when K-tiled); grid-invariant operands are single-buffered.
        w0_bufs = 1 if k_steps == 1 else 2
        return (
            2 * bb * tk * x.dtype.itemsize          # x tile, double-buffered
            + 2 * bb * Cp * out_itemsize            # out tile, double-buffered
            + w0_bufs * tk * Hp * 2                 # bf16 w0 (slice)
            + Hp * Cp * 2                           # bf16 w1, single-buffered
            + (Hp + Cp) * 4                         # f32 biases, single-buffered
            + (bb * Hp * 4 if k_steps > 1 else 0)   # f32 accumulator scratch
            + (512 << 10)                           # Mosaic internal scratch headroom
        )

    # Shrink the batch tile if the exact footprint would not fit the budget.
    while block_b > _SUBLANE and resident_bytes(block_b) > vmem_budget:
        block_b = max(_SUBLANE, _round_up(block_b // 2, _SUBLANE))

    vmem_limit = int(min(max(resident_bytes(block_b) + (2 << 20), 16 << 20),
                         vmem_budget))

    flops = 2 * B * D * Hp + 2 * B * Hp * Cp
    bytes_accessed = (B * D * x.dtype.itemsize + (D * Hp + Hp * Cp) * 2
                      + (Hp + Cp) * 4 + B * Cp * out_itemsize)
    cost = pl.CostEstimate(flops=flops, transcendentals=0,
                           bytes_accessed=bytes_accessed)

    def inv_spec(shape, index_map):
        # Grid-invariant block: a second pipeline buffer is pure waste.
        if single_buffer_invariants:
            return pl.BlockSpec(shape, index_map, pipeline_mode=pl.Buffered(1))
        return pl.BlockSpec(shape, index_map)

    if k_steps == 1:
        grid = (pl.cdiv(B, block_b),)
        out_padded = pl.pallas_call(
            _mlp_kernel_fused,
            out_shape=jax.ShapeDtypeStruct((B, Cp), out_dtype),
            grid_spec=pltpu.PrefetchScalarGridSpec(
                num_scalar_prefetch=0,
                grid=grid,
                in_specs=[
                    pl.BlockSpec((block_b, D), lambda i: (i, 0)),   # x batch tile
                    inv_spec((D, Hp), lambda i: (0, 0)),            # w0 (resident)
                    inv_spec((1, Hp), lambda i: (0, 0)),            # b0
                    inv_spec((Hp, Cp), lambda i: (0, 0)),           # w1
                    inv_spec((1, Cp), lambda i: (0, 0)),            # b1
                ],
                out_specs=pl.BlockSpec((block_b, Cp), lambda i: (i, 0)),
            ),
            compiler_params=pltpu.CompilerParams(
                dimension_semantics=("parallel",),
                vmem_limit_bytes=vmem_limit,
            ),
            cost_estimate=cost,
        )(x, w0_t, b0_p, w1_t, b1_p)
    else:
        grid = (pl.cdiv(B, block_b), k_steps)
        out_padded = pl.pallas_call(
            _mlp_kernel_ktiled,
            out_shape=jax.ShapeDtypeStruct((B, Cp), out_dtype),
            grid_spec=pltpu.PrefetchScalarGridSpec(
                num_scalar_prefetch=0,
                grid=grid,
                in_specs=[
                    pl.BlockSpec((block_b, tk), lambda i, k: (i, k)),  # x tile
                    pl.BlockSpec((tk, Hp), lambda i, k: (k, 0)),       # w0 slice
                    inv_spec((1, Hp), lambda i, k: (0, 0)),            # b0
                    inv_spec((Hp, Cp), lambda i, k: (0, 0)),           # w1
                    inv_spec((1, Cp), lambda i, k: (0, 0)),            # b1
                ],
                out_specs=pl.BlockSpec((block_b, Cp), lambda i, k: (i, 0)),
                scratch_shapes=[pltpu.VMEM((block_b, Hp), jnp.float32)],
            ),
            compiler_params=pltpu.CompilerParams(
                dimension_semantics=("parallel", "arbitrary"),
                vmem_limit_bytes=vmem_limit,
            ),
            cost_estimate=cost,
        )(x, w0_t, b0_p, w1_t, b1_p)

    # Drop the zero-padded class columns (kernel stores stay lane-dense).
    return out_padded[:, :num_classes]


def mlp_simple_forward(x, w0_t, b0_p, w1_t, b1_p, *, num_classes,
                       out_dtype=jnp.bfloat16, block_b=None):
    """x: [B, D] (f32 or bf16); params from prepare_mlp_params()."""
    try:
        return _mlp_forward_impl(x, w0_t, b0_p, w1_t, b1_p,
                                 num_classes=num_classes, out_dtype=out_dtype,
                                 block_b=block_b, single_buffer_invariants=True)
    except Exception:
        # Fallback for jax builds where pipeline_mode=pl.Buffered(1) on TPU
        # BlockSpecs is unsupported: identical kernel, default double-buffering.
        return _mlp_forward_impl(x, w0_t, b0_p, w1_t, b1_p,
                                 num_classes=num_classes, out_dtype=out_dtype,
                                 block_b=block_b, single_buffer_invariants=False)


def _torch_style_linear_init(key, out_features, in_features):
    """Mimics PyTorch nn.Linear default init: U(-k, k), k = 1/sqrt(fan_in)."""
    kw, kb = jax.random.split(key)
    bound = 1.0 / (in_features ** 0.5)
    w = jax.random.uniform(kw, (out_features, in_features), jnp.float32, -bound, bound)
    b = jax.random.uniform(kb, (out_features,), jnp.float32, -bound, bound)
    return w, b


if __name__ == "__main__":
    # MLP_simple(input_dim=32, num_classes=4, num_units=16) at a small batch.
    batch, input_dim, num_units, num_classes = 8, 32, 16, 4

    root = jax.random.PRNGKey(0)
    k_x, k_l0, k_l1 = jax.random.split(root, 3)

    x = jax.random.normal(k_x, (batch, input_dim), jnp.float32)
    w0, b0 = _torch_style_linear_init(k_l0, num_units, input_dim)    # dense0
    w1, b1 = _torch_style_linear_init(k_l1, num_classes, num_units)  # output

    # One-time parameter prep (transpose + pad + bf16 cast) outside the forward.
    params = prepare_mlp_params(w0, b0, w1, b1)

    out = mlp_simple_forward(x, *params, num_classes=num_classes)
    out = jax.block_until_ready(out)

    # Reference in plain f32 JAX (same math as the PyTorch forward).
    ref = jnp.maximum(x @ w0.T + b0, 0.0) @ w1.T + b1
    assert out.shape == (batch, num_classes)
    # bf16 MXU operands / bf16 logits store with f32 accumulation.
    assert jnp.allclose(out.astype(jnp.float32), ref, atol=5e-2, rtol=5e-2)

    print("KERNEL_OK")
</pallas_src>

<mosaic_0001>
module attributes {stable_mosaic.version = 11 : i64} {
  func.func @_mlp_kernel_fused(%arg0: i32, %arg1: memref<8x32xf32, #tpu.memory_space<vmem>>, %arg2: memref<32x128xbf16, #tpu.memory_space<vmem>>, %arg3: memref<1x128xf32, #tpu.memory_space<vmem>>, %arg4: memref<128x128xbf16, #tpu.memory_space<vmem>>, %arg5: memref<1x128xf32, #tpu.memory_space<vmem>>, %arg6: memref<8x128xbf16, #tpu.memory_space<vmem>>) attributes {dimension_semantics = [#tpu.dimension_semantics<parallel>], iteration_bounds = array<i64: 1>, scalar_prefetch = 0 : i64, scratch_operands = 0 : i64, tpu.core_type = #tpu.core_type<tc>, window_params = [{transform_indices = @transform_0, window_bounds = array<i64: 8, 32>}, {pipeline_mode = #tpu.pipeline_mode<synchronous>, transform_indices = @transform_1, window_bounds = array<i64: 32, 128>}, {pipeline_mode = #tpu.pipeline_mode<synchronous>, transform_indices = @transform_2, window_bounds = array<i64: 1, 128>}, {pipeline_mode = #tpu.pipeline_mode<synchronous>, transform_indices = @transform_3, window_bounds = array<i64: 128, 128>}, {pipeline_mode = #tpu.pipeline_mode<synchronous>, transform_indices = @transform_4, window_bounds = array<i64: 1, 128>}, {transform_indices = @transform_5, window_bounds = array<i64: 8, 128>}]} {
    %c0 = arith.constant 0 : index
    %c0_0 = arith.constant 0 : index
    %0 = vector.load %arg1[%c0, %c0_0] : memref<8x32xf32, #tpu.memory_space<vmem>>, vector<8x32xf32>
    %1 = arith.truncf %0 : vector<8x32xf32> to vector<8x32xbf16>
    %c0_1 = arith.constant 0 : index
    %c0_2 = arith.constant 0 : index
    %2 = vector.load %arg2[%c0_1, %c0_2] : memref<32x128xbf16, #tpu.memory_space<vmem>>, vector<32x128xbf16>
    %cst = arith.constant dense<0.000000e+00> : vector<8x128xf32>
    %3 = tpu.matmul %1, %2, %cst {dimension_numbers = #tpu.dot_dimension_numbers<[1], [0], [0], [1], [0, 0, 1, 1], [], []>} : vector<8x32xbf16>, vector<32x128xbf16>, vector<8x128xf32> -> vector<8x128xf32>
    %c0_3 = arith.constant 0 : index
    %c0_4 = arith.constant 0 : index
    %4 = vector.load %arg3[%c0_3, %c0_4] : memref<1x128xf32, #tpu.memory_space<vmem>>, vector<1x128xf32>
    %5 = vector.broadcast %4 : vector<1x128xf32> to vector<8x128xf32>
    %6 = arith.addf %3, %5 : vector<8x128xf32>
    %cst_5 = arith.constant 0.000000e+00 : f32
    %7 = vector.broadcast %cst_5 : f32 to vector<8x128xf32>
    %8 = arith.maximumf %6, %7 : vector<8x128xf32>
    %9 = arith.truncf %8 : vector<8x128xf32> to vector<8x128xbf16>
    %c0_6 = arith.constant 0 : index
    %c0_7 = arith.constant 0 : index
    %10 = vector.load %arg4[%c0_6, %c0_7] : memref<128x128xbf16, #tpu.memory_space<vmem>>, vector<128x128xbf16>
    %cst_8 = arith.constant dense<0.000000e+00> : vector<8x128xf32>
    %11 = tpu.matmul %9, %10, %cst_8 {dimension_numbers = #tpu.dot_dimension_numbers<[1], [0], [0], [1], [0, 0, 1, 1], [], []>} : vector<8x128xbf16>, vector<128x128xbf16>, vector<8x128xf32> -> vector<8x128xf32>
    %c0_9 = arith.constant 0 : index
    %c0_10 = arith.constant 0 : index
    %12 = vector.load %arg5[%c0_9, %c0_10] : memref<1x128xf32, #tpu.memory_space<vmem>>, vector<1x128xf32>
    %13 = vector.broadcast %12 : vector<1x128xf32> to vector<8x128xf32>
    %14 = arith.addf %11, %13 : vector<8x128xf32>
    %15 = arith.truncf %14 : vector<8x128xf32> to vector<8x128xbf16>
    %c0_11 = arith.constant 0 : index
    %c0_12 = arith.constant 0 : index
    %16 = vector.load %arg6[%c0_11, %c0_12] : memref<8x128xbf16, #tpu.memory_space<vmem>>, vector<8x128xbf16>
    tpu.vector_store %arg6[%c0_11, %c0_12], %15 {strides = array<i32>} : memref<8x128xbf16, #tpu.memory_space<vmem>>, vector<8x128xbf16>,
    return
  }
  func.func @transform_0(%arg0: i32) -> (i32, i32) {
    %c0_i32 = arith.constant 0 : i32
    %c0_i32_0 = arith.constant 0 : i32
    return %arg0, %c0_i32 : i32, i32
  }
  func.func @transform_1(%arg0: i32) -> (i32, i32) {
    %c0_i32 = arith.constant 0 : i32
    %c0_i32_0 = arith.constant 0 : i32
    %c0_i32_1 = arith.constant 0 : i32
    return %c0_i32, %c0_i32_0 : i32, i32
  }
  func.func @transform_2(%arg0: i32) -> (i32, i32) {
    %c0_i32 = arith.constant 0 : i32
    %c0_i32_0 = arith.constant 0 : i32
    %c0_i32_1 = arith.constant 0 : i32
    return %c0_i32, %c0_i32_0 : i32, i32
  }
  func.func @transform_3(%arg0: i32) -> (i32, i32) {
    %c0_i32 = arith.constant 0 : i32
    %c0_i32_0 = arith.constant 0 : i32
    %c0_i32_1 = arith.constant 0 : i32
    return %c0_i32, %c0_i32_0 : i32, i32
  }
  func.func @transform_4(%arg0: i32) -> (i32, i32) {
    %c0_i32 = arith.constant 0 : i32
    %c0_i32_0 = arith.constant 0 : i32
    %c0_i32_1 = arith.constant 0 : i32
    return %c0_i32, %c0_i32_0 : i32, i32
  }
  func.func @transform_5(%arg0: i32) -> (i32, i32) {
    %c0_i32 = arith.constant 0 : i32
    %c0_i32_0 = arith.constant 0 : i32
    return %arg0, %c0_i32 : i32, i32
  }
}

module attributes {stable_mosaic.version = 11 : i64} {
  func.func @_mlp_kernel_fused(%arg0: i32, %arg1: memref<8x32xf32, #tpu.memory_space<vmem>>, %arg2: memref<32x128xbf16, #tpu.memory_space<vmem>>, %arg3: memref<1x128xf32, #tpu.memory_space<vmem>>, %arg4: memref<128x128xbf16, #tpu.memory_space<vmem>>, %arg5: memref<1x128xf32, #tpu.memory_space<vmem>>, %arg6: memref<8x128xbf16, #tpu.memory_space<vmem>>) attributes {dimension_semantics = [#tpu.dimension_semantics<parallel>], iteration_bounds = array<i64: 1>, scalar_prefetch = 0 : i64, scratch_operands = 0 : i64, tpu.core_type = #tpu.core_type<tc>, window_params = [{transform_indices = @transform_0, window_bounds = array<i64: 8, 32>}, {pipeline_mode = #tpu.pipeline_mode<synchronous>, transform_indices = @transform_1, window_bounds = array<i64: 32, 128>}, {pipeline_mode = #tpu.pipeline_mode<synchronous>, transform_indices = @transform_2, window_bounds = array<i64: 1, 128>}, {pipeline_mode = #tpu.pipeline_mode<synchronous>, transform_indices = @transform_3, window_bounds = array<i64: 128, 128>}, {pipeline_mode = #tpu.pipeline_mode<synchronous>, transform_indices = @transform_4, window_bounds = array<i64: 1, 128>}, {transform_indices = @transform_5, window_bounds = array<i64: 8, 128>}]} {
    %c0 = arith.constant 0 : index
    %c0_0 = arith.constant 0 : index
    %0 = vector.load %arg1[%c0, %c0_0] : memref<8x32xf32, #tpu.memory_space<vmem>>, vector<8x32xf32>
    %1 = arith.truncf %0 : vector<8x32xf32> to vector<8x32xbf16>
    %c0_1 = arith.constant 0 : index
    %c0_2 = arith.constant 0 : index
    %2 = vector.load %arg2[%c0_1, %c0_2] : memref<32x128xbf16, #tpu.memory_space<vmem>>, vector<32x128xbf16>
    %cst = arith.constant dense<0.000000e+00> : vector<8x128xf32>
    %3 = tpu.matmul %1, %2, %cst {dimension_numbers = #tpu.dot_dimension_numbers<[1], [0], [0], [1], [0, 0, 1, 1], [], []>} : vector<8x32xbf16>, vector<32x128xbf16>, vector<8x128xf32> -> vector<8x128xf32>
    %c0_3 = arith.constant 0 : index
    %c0_4 = arith.constant 0 : index
    %4 = vector.load %arg3[%c0_3, %c0_4] : memref<1x128xf32, #tpu.memory_space<vmem>>, vector<1x128xf32>
    %5 = vector.broadcast %4 : vector<1x128xf32> to vector<8x128xf32>
    %6 = arith.addf %3, %5 : vector<8x128xf32>
    %cst_5 = arith.constant 0.000000e+00 : f32
    %7 = vector.broadcast %cst_5 : f32 to vector<8x128xf32>
    %8 = arith.maximumf %6, %7 : vector<8x128xf32>
    %9 = arith.truncf %8 : vector<8x128xf32> to vector<8x128xbf16>
    %c0_6 = arith.constant 0 : index
    %c0_7 = arith.constant 0 : index
    %10 = vector.load %arg4[%c0_6, %c0_7] : memref<128x128xbf16, #tpu.memory_space<vmem>>, vector<128x128xbf16>
    %cst_8 = arith.constant dense<0.000000e+00> : vector<8x128xf32>
    %11 = tpu.matmul %9, %10, %cst_8 {dimension_numbers = #tpu.dot_dimension_numbers<[1], [0], [0], [1], [0, 0, 1, 1], [], []>} : vector<8x128xbf16>, vector<128x128xbf16>, vector<8x128xf32> -> vector<8x128xf32>
    %c0_9 = arith.constant 0 : index
    %c0_10 = arith.constant 0 : index
    %12 = vector.load %arg5[%c0_9, %c0_10] : memref<1x128xf32, #tpu.memory_space<vmem>>, vector<1x128xf32>
    %13 = vector.broadcast %12 : vector<1x128xf32> to vector<8x128xf32>
    %14 = arith.addf %11, %13 : vector<8x128xf32>
    %15 = arith.truncf %14 : vector<8x128xf32> to vector<8x128xbf16>
    %c0_11 = arith.constant 0 : index
    %c0_12 = arith.constant 0 : index
    %16 = vector.load %arg6[%c0_11, %c0_12] : memref<8x128xbf16, #tpu.memory_space<vmem>>, vector<8x128xbf16>
    tpu.vector_store %arg6[%c0_11, %c0_12], %15 {strides = array<i32>} : memref<8x128xbf16, #tpu.memory_space<vmem>>, vector<8x128xbf16>,
    return
  }
  func.func @transform_0(%arg0: i32) -> (i32, i32) {
    %c0_i32 = arith.constant 0 : i32
    %c0_i32_0 = arith.constant 0 : i32
    return %arg0, %c0_i32 : i32, i32
  }
  func.func @transform_1(%arg0: i32) -> (i32, i32) {
    %c0_i32 = arith.constant 0 : i32
    %c0_i32_0 = arith.constant 0 : i32
    %c0_i32_1 = arith.constant 0 : i32
    return %c0_i32, %c0_i32_0 : i32, i32
  }
  func.func @transform_2(%arg0: i32) -> (i32, i32) {
    %c0_i32 = arith.constant 0 : i32
    %c0_i32_0 = arith.constant 0 : i32
    %c0_i32_1 = arith.constant 0 : i32
    return %c0_i32, %c0_i32_0 : i32, i32
  }
  func.func @transform_3(%arg0: i32) -> (i32, i32) {
    %c0_i32 = arith.constant 0 : i32
    %c0_i32_0 = arith.constant 0 : i32
    %c0_i32_1 = arith.constant 0 : i32
    return %c0_i32, %c0_i32_0 : i32, i32
  }
  func.func @transform_4(%arg0: i32) -> (i32, i32) {
    %c0_i32 = arith.constant 0 : i32
    %c0_i32_0 = arith.constant 0 : i32
    %c0_i32_1 = arith.constant 0 : i32
    return %c0_i32, %c0_i32_0 : i32, i32
  }
  func.func @transform_5(%arg0: i32) -> (i32, i32) {
    %c0_i32 = arith.constant 0 : i32
    %c0_i32_0 = arith.constant 0 : i32
    return %arg0, %c0_i32 : i32, i32
  }
}

</mosaic_0001>

<llo_original>
// kernel: _mlp_forward_impl.1
$region0: #{_mlp_forward_impl.1}
  #allocation0 [shape = 'u32[]', space=smem, size = 0x4, offset = 0x4, fixed_abs, tag = 'smem constant byte address 0x4 - core index']
  #allocation1 [shape = 'u32[144,128]{1,0:T(1,128)}', space=vmem, size = 0x12000, scoped, tag = 'internal scratch']
  %s0 = inlined_call_operand.hbm [shape: f32[8,32], index: 0, kind: input, shape index: {}]
  %s1 = inlined_call_operand.hbm [shape: bf16[32,128], index: 1, kind: input, shape index: {}]
  %s2 = inlined_call_operand.vmem [shape: f32[1,128], index: 2, kind: input, shape index: {}]
  %s3 = inlined_call_operand.hbm [shape: bf16[128,128], index: 3, kind: input, shape index: {}]
  %s4 = inlined_call_operand.vmem [shape: f32[1,128], index: 4, kind: input, shape index: {}]
  %s5 = inlined_call_operand.vmem [shape: bf16[8,128], index: 5, kind: output, shape index: {}]
  %s6 = sld [smem:[#allocation0]]
  $region42: #{_mlp_forward_impl.1} parent=0
    _
  %s8 = ssub.s32 1, %s6
  %s9 = scalar_select 0, %s8, %s6
  $region1: #{_mlp_forward_impl.1} parent=0
    #allocation2 [shape = 'u8[4096]{0}', space=vmem, size = 0x1000, scoped, tag = 'input window, operand 0, single buffered']
    #allocation3 [shape = 's32[1]{0}', space=sflag, size = 0x4, scoped, tag = 'scoped memory for _mlp_forward_impl.1']
    #allocation4 [shape = 'u8[8192]{0}', space=vmem, size = 0x2000, scoped, tag = 'input window, operand 1, single buffered']
    #allocation5 [shape = 's32[1]{0}', space=sflag, size = 0x4, scoped, tag = 'scoped memory for _mlp_forward_impl.1']
    #allocation6 [shape = 'u8[32768]{0}', space=vmem, size = 0x8000, scoped, tag = 'input window, operand 3, single buffered']
    %10 = vsyncpa [#allocation3], 0
    %11 = vsyncpa [#allocation5], 0
    // Predicated region
    $region2: #{_mlp_forward_impl.1} parent=1 // pred_check
      _
    $region3: #{_mlp_forward_impl.1} parent=1 // pred_check_branch
      %13 = sbr.rel (0) target = $region5
    $region4: #{_mlp_forward_impl.1} parent=1 // pred_region
      %s15 = ssub.s32 128, 128
      %16 = vsyncadd [#allocation3], %s15
      %s18 = sshll.u32 [#allocation2], 4
      %s19 = int_to_ptr.vmem [resolvable:$true] %s18
      %21 = dma.hbm_to_vmem [thread:$0]  %s0, 128, %s19, [#allocation3]
    $region5: #{_mlp_forward_impl.1} parent=1 // pred_fallthru
      _
    // Predicated region
    $region6: #{_mlp_forward_impl.1} parent=1 // pred_check
      _
    $region7: #{_mlp_forward_impl.1} parent=1 // pred_check_branch
      %23 = sbr.rel (0) target = $region9
    $region8: #{_mlp_forward_impl.1} parent=1 // pred_region
      %s25 = ssub.s32 256, 256
      %26 = vsyncadd [#allocation5], %s25
      %s27 = sshll.u32 [#allocation4], 4
      %s28 = int_to_ptr.vmem [resolvable:$true] %s27
      %33 = dma.hbm_to_vmem [thread:$0]  %s1, 256, %s28, [#allocation5], 64, 64, 4
    $region9: #{_mlp_forward_impl.1} parent=1 // pred_fallthru
      _
    // Predicated region
    $region10: #{_mlp_forward_impl.1} parent=1 // pred_check
      _
    $region11: #{_mlp_forward_impl.1} parent=1 // pred_check_branch
      %35 = sbr.rel (0) target = $region13
    $region12: #{_mlp_forward_impl.1} parent=1 // pred_region
      _
    $region13: #{_mlp_forward_impl.1} parent=1 // pred_fallthru
      _
    // Predicated region
    $region14: #{_mlp_forward_impl.1} parent=1 // pred_check
      _
    $region15: #{_mlp_forward_impl.1} parent=1 // pred_check_branch
      %37 = sbr.rel (0) target = $region17
    $region16: #{_mlp_forward_impl.1} parent=1 // pred_region
      %s39 = ssub.s32 1024, 1024
      %40 = vsyncadd [#allocation5], %s39
      %s41 = sshll.u32 [#allocation6], 4
      %s42 = int_to_ptr.vmem [resolvable:$true] %s41
      %47 = dma.hbm_to_vmem [thread:$0]  %s3, 1024, %s42, [#allocation5], 64, 64, 4
    $region17: #{_mlp_forward_impl.1} parent=1 // pred_fallthru
      _
    // Predicated region
    $region18: #{_mlp_forward_impl.1} parent=1 // pred_check
      _
    $region19: #{_mlp_forward_impl.1} parent=1 // pred_check_branch
      %49 = sbr.rel (0) target = $region21
    $region20: #{_mlp_forward_impl.1} parent=1 // pred_region
      _
    $region21: #{_mlp_forward_impl.1} parent=1 // pred_fallthru
      _
    // Predicated region
    $region22: #{_mlp_forward_impl.1} parent=1 // pred_check
      _
    $region23: #{_mlp_forward_impl.1} parent=1 // pred_check_branch
      %51 = sbr.rel (0) target = $region25
    $region24: #{_mlp_forward_impl.1} parent=1 // pred_region
      %52 = dma.done [#allocation3], 128
    $region25: #{_mlp_forward_impl.1} parent=1 // pred_fallthru
      _
    // Predicated region
    $region26: #{_mlp_forward_impl.1} parent=1 // pred_check
      _
    $region27: #{_mlp_forward_impl.1} parent=1 // pred_check_branch
      %54 = sbr.rel (0) target = $region29
    $region28: #{_mlp_forward_impl.1} parent=1 // pred_region
      %55 = dma.done [#allocation5], 256
    $region29: #{_mlp_forward_impl.1} parent=1 // pred_fallthru
      _
    // Predicated region
    $region30: #{_mlp_forward_impl.1} parent=1 // pred_check
      _
    $region31: #{_mlp_forward_impl.1} parent=1 // pred_check_branch
      %57 = sbr.rel (0) target = $region33
    $region32: #{_mlp_forward_impl.1} parent=1 // pred_region
      %58 = dma.done [#allocation5], 1024
    $region33: #{_mlp_forward_impl.1} parent=1 // pred_fallthru
      _
    %v60 = vld [vmem:[#allocation2] sm:$0xff]
    %v61 = vpack.c.bf16 %v60, %v60
    %v62 = vld [vmem:[#allocation4] sm:$0xf]
    %v63 = vld [vmem:[#allocation4 + $0x4] sm:$0xf]
    %v64 = vld [vmem:[#allocation4 + $0x8] sm:$0xf]
    %v65 = vld [vmem:[#allocation4 + $0xc] sm:$0xf]
    %v66 = vld [vmem:[%s2] sm:$0x1]
    %v68 = vlaneseq
    %v69 = vshrl.u32 %v68, 7
    %v70 = vsub.s32 0, %v69
    %v71 = vrot.slane %v66, %v70
    %v77 = vunpack.c.l.b16 %v62
    %v78 = vunpack.c.l.b16 %v63
    %v79 = vunpack.c.l.b16 %v64
    %v80 = vunpack.c.l.b16 %v65
    %v81 = vpack.c.b16 %v78, %v77
    %v82 = vpack.c.b16 %v80, %v79
    %vm85 = vcmask 261120
    %v87 = vsel %vm85, %v61, 0
    %89 = vmatprep.subr.bf16.mxu0 0
    %90 = vmatpush1.bf16.msra.mxu0 %v81
    %91 = vmatprep.subr.bf16.mxu0 0
    %92 = vmatpush1.bf16.msra.mxu0 %v82
    %93 = vmatprep.subr.bf16.mxu0 0
    %94 = vmatpush1.bf16.msra.mxu0 0
    %95 = vmatprep.subr.bf16.mxu0 0
    %96 = vmatpush1.bf16.msra.mxu0 0
    %97 = vmatprep.subr.bf16.mxu0 0
    %98 = vmatpush1.bf16.msra.mxu0 0
    %99 = vmatprep.subr.bf16.mxu0 0
    %100 = vmatpush1.bf16.msra.mxu0 0
    %101 = vmatprep.subr.bf16.mxu0 0
    %102 = vmatpush1.bf16.msra.mxu0 0
    %103 = vmatprep.subr.bf16.mxu0 0
    %104 = vmatpush1.bf16.msra.mxu0 0
    %105 = vmatprep.subr.bf16.mxu0 0
    %106 = vmatpush1.bf16.msra.mxu0 0
    %107 = vmatprep.subr.bf16.mxu0 0
    %108 = vmatpush1.bf16.msra.mxu0 0
    %109 = vmatprep.subr.bf16.mxu0 0
    %110 = vmatpush1.bf16.msra.mxu0 0
    %111 = vmatprep.subr.bf16.mxu0 0
    %112 = vmatpush1.bf16.msra.mxu0 0
    %113 = vmatprep.subr.bf16.mxu0 0
    %114 = vmatpush1.bf16.msra.mxu0 0
    %115 = vmatprep.subr.bf16.mxu0 0
    %116 = vmatpush1.bf16.msra.mxu0 0
    %117 = vmatprep.subr.bf16.mxu0 0
    %118 = vmatpush1.bf16.msra.mxu0 0
    %119 = vmatprep.subr.bf16.mxu0 0
    %120 = vmatpush1.bf16.msra.mxu0 0
    %121 = vmatprep.mubr.bf16.mxu0 0
    %122 = vmatmul.mubr.bf16.gmra.mrb[0].mxu0 %v87
    %v123 = vpop.f32.mrb[0].mxu0
    %v124 = vadd.f32 %v71, %v123
    %v125 = vpop.f32.mrb[0].mxu0
    %v126 = vpop.f32.mrb[0].mxu0
    %v127 = vpop.f32.mrb[0].mxu0
    %128 = vdwg.mxu0
    %v129 = vmax.f32 %v124, 0.0
    %v130 = vpack.c.bf16 %v129, %v129
    %v131 = vld [vmem:[#allocation6] sm:$0xf]
    %v132 = vld [vmem:[#allocation6 + $0x4] sm:$0xf]
    %v133 = vld [vmem:[#allocation6 + $0x8] sm:$0xf]
    %v134 = vld [vmem:[#allocation6 + $0xc] sm:$0xf]
    %v135 = vld [vmem:[#allocation6 + $0x10] sm:$0xf]
    %v136 = vld [vmem:[#allocation6 + $0x14] sm:$0xf]
    %v137 = vld [vmem:[#allocation6 + $0x18] sm:$0xf]
    %v138 = vld [vmem:[#allocation6 + $0x1c] sm:$0xf]
    %v139 = vld [vmem:[#allocation6 + $0x20] sm:$0xf]
    %v140 = vld [vmem:[#allocation6 + $0x24] sm:$0xf]
    %v141 = vld [vmem:[#allocation6 + $0x28] sm:$0xf]
    %v142 = vld [vmem:[#allocation6 + $0x2c] sm:$0xf]
    %v143 = vld [vmem:[#allocation6 + $0x30] sm:$0xf]
    %v144 = vld [vmem:[#allocation6 + $0x34] sm:$0xf]
    %v145 = vld [vmem:[#allocation6 + $0x38] sm:$0xf]
    %v146 = vld [vmem:[#allocation6 + $0x3c] sm:$0xf]
    %v147 = vld [vmem:[%s4] sm:$0x1]
    %v149 = vlaneseq
    %v150 = vshrl.u32 %v149, 7
    %v151 = vsub.s32 0, %v150
    %v152 = vrot.slane %v147, %v151
    %v170 = vunpack.c.l.b16 %v131
    %v171 = vunpack.c.l.b16 %v132
    %v172 = vunpack.c.l.b16 %v133
    %v173 = vunpack.c.l.b16 %v134
    %v174 = vunpack.c.l.b16 %v135
    %v175 = vunpack.c.l.b16 %v136
    %v176 = vunpack.c.l.b16 %v137
    %v177 = vunpack.c.l.b16 %v138
    %v178 = vunpack.c.l.b16 %v139
    %v179 = vunpack.c.l.b16 %v140
    %v180 = vunpack.c.l.b16 %v141
    %v181 = vunpack.c.l.b16 %v142
    %v182 = vunpack.c.l.b16 %v143
    %v183 = vunpack.c.l.b16 %v144
    %v184 = vunpack.c.l.b16 %v145
    %v185 = vunpack.c.l.b16 %v146
    %v186 = vpack.c.b16 %v171, %v170
    %v187 = vpack.c.b16 %v173, %v172
    %v188 = vpack.c.b16 %v175, %v174
    %v189 = vpack.c.b16 %v177, %v176
    %v190 = vpack.c.b16 %v179, %v178
    %v191 = vpack.c.b16 %v181, %v180
    %v192 = vpack.c.b16 %v183, %v182
    %v193 = vpack.c.b16 %v185, %v184
    %202 = vmatprep.subr.bf16.mxu0 0
    %203 = vmatpush1.bf16.msra.mxu0 %v186
    %204 = vmatprep.subr.bf16.mxu0 0
    %205 = vmatpush1.bf16.msra.mxu0 %v187
    %206 = vmatprep.subr.bf16.mxu0 0
    %207 = vmatpush1.bf16.msra.mxu0 %v188
    %208 = vmatprep.subr.bf16.mxu0 0
    %209 = vmatpush1.bf16.msra.mxu0 %v189
    %210 = vmatprep.subr.bf16.mxu0 0
    %211 = vmatpush1.bf16.msra.mxu0 %v190
    %212 = vmatprep.subr.bf16.mxu0 0
    %213 = vmatpush1.bf16.msra.mxu0 %v191
    %214 = vmatprep.subr.bf16.mxu0 0
    %215 = vmatpush1.bf16.msra.mxu0 %v192
    %216 = vmatprep.subr.bf16.mxu0 0
    %217 = vmatpush1.bf16.msra.mxu0 %v193
    %218 = vmatprep.subr.bf16.mxu0 0
    %219 = vmatpush1.bf16.msra.mxu0 0
    %220 = vmatprep.subr.bf16.mxu0 0
    %221 = vmatpush1.bf16.msra.mxu0 0
    %222 = vmatprep.subr.bf16.mxu0 0
    %223 = vmatpush1.bf16.msra.mxu0 0
    %224 = vmatprep.subr.bf16.mxu0 0
    %225 = vmatpush1.bf16.msra.mxu0 0
    %226 = vmatprep.subr.bf16.mxu0 0
    %227 = vmatpush1.bf16.msra.mxu0 0
    %228 = vmatprep.subr.bf16.mxu0 0
    %229 = vmatpush1.bf16.msra.mxu0 0
    %230 = vmatprep.subr.bf16.mxu0 0
    %231 = vmatpush1.bf16.msra.mxu0 0
    %232 = vmatprep.subr.bf16.mxu0 0
    %233 = vmatpush1.bf16.msra.mxu0 0
    %234 = vmatprep.mubr.bf16.mxu0 0
    %235 = vmatmul.mubr.bf16.gmra.mrb[0].mxu0 %v130
    %v236 = vpop.f32.mrb[0].mxu0
    %v237 = vadd.f32 %v152, %v236
    %v238 = vpop.f32.mrb[0].mxu0
    %v239 = vpop.f32.mrb[0].mxu0
    %v240 = vpop.f32.mrb[0].mxu0
    %241 = vdwg.mxu0
    %v242 = vpack.c.bf16 %v237, %v237
    %243 = vst [vmem:[%s5] sm:$0xf] %v242
    // Predicated region
    $region34: #{_mlp_forward_impl.1} parent=1 // pred_check
      _
    $region35: #{_mlp_forward_impl.1} parent=1 // pred_check_branch
      %245 = sbr.rel (0) target = $region37
    $region36: #{_mlp_forward_impl.1} parent=1 // pred_region
      _
    $region37: #{_mlp_forward_impl.1} parent=1 // pred_fallthru
      _
    // Predicated region
    $region38: #{_mlp_forward_impl.1} parent=1 // pred_check
      _
    $region39: #{_mlp_forward_impl.1} parent=1 // pred_check_branch
      %247 = sbr.rel (0) target = $region41
    $region40: #{_mlp_forward_impl.1} parent=1 // pred_region
      _
    $region41: #{_mlp_forward_impl.1} parent=1 // pred_fallthru
      _
    %248 = vsyncpa [#allocation3], 1
    %249 = vsyncpa [#allocation5], 1

// kernel: _mlp_forward_impl.1
$region0: #{_mlp_forward_impl.1}
  #allocation0 [shape = 'u32[]', space=smem, size = 0x4, offset = 0x4, fixed_abs, tag = 'smem constant byte address 0x4 - core index']
  #allocation1 [shape = 'u32[144,128]{1,0:T(1,128)}', space=vmem, size = 0x12000, scoped, tag = 'internal scratch']
  %s0 = inlined_call_operand.hbm [shape: f32[8,32], index: 0, kind: input, shape index: {}]
  %s1 = inlined_call_operand.hbm [shape: bf16[32,128], index: 1, kind: input, shape index: {}]
  %s2 = inlined_call_operand.vmem [shape: f32[1,128], index: 2, kind: input, shape index: {}]
  %s3 = inlined_call_operand.hbm [shape: bf16[128,128], index: 3, kind: input, shape index: {}]
  %s4 = inlined_call_operand.vmem [shape: f32[1,128], index: 4, kind: input, shape index: {}]
  %s5 = inlined_call_operand.vmem [shape: bf16[8,128], index: 5, kind: output, shape index: {}]
  %s6 = sld [smem:[#allocation0]]
  $region42: #{_mlp_forward_impl.1} parent=0
    _
  %s8 = ssub.s32 1, %s6
  %s9 = scalar_select 0, %s8, %s6
  $region1: #{_mlp_forward_impl.1} parent=0
    #allocation2 [shape = 'u8[4096]{0}', space=vmem, size = 0x1000, scoped, tag = 'input window, operand 0, single buffered']
    #allocation3 [shape = 's32[1]{0}', space=sflag, size = 0x4, scoped, tag = 'scoped memory for _mlp_forward_impl.1']
    #allocation4 [shape = 'u8[8192]{0}', space=vmem, size = 0x2000, scoped, tag = 'input window, operand 1, single buffered']
    #allocation5 [shape = 's32[1]{0}', space=sflag, size = 0x4, scoped, tag = 'scoped memory for _mlp_forward_impl.1']
    #allocation6 [shape = 'u8[32768]{0}', space=vmem, size = 0x8000, scoped, tag = 'input window, operand 3, single buffered']
    %10 = vsyncpa [#allocation3], 0
    %11 = vsyncpa [#allocation5], 0
    // Predicated region
    $region2: #{_mlp_forward_impl.1} parent=1 // pred_check
      _
    $region3: #{_mlp_forward_impl.1} parent=1 // pred_check_branch
      %13 = sbr.rel (0) target = $region5
    $region4: #{_mlp_forward_impl.1} parent=1 // pred_region
      %s15 = ssub.s32 128, 128
      %16 = vsyncadd [#allocation3], %s15
      %s18 = sshll.u32 [#allocation2], 4
      %s19 = int_to_ptr.vmem [resolvable:$true] %s18
      %21 = dma.hbm_to_vmem [thread:$0]  %s0, 128, %s19, [#allocation3]
    $region5: #{_mlp_forward_impl.1} parent=1 // pred_fallthru
      _
    // Predicated region
    $region6: #{_mlp_forward_impl.1} parent=1 // pred_check
      _
    $region7: #{_mlp_forward_impl.1} parent=1 // pred_check_branch
      %23 = sbr.rel (0) target = $region9
    $region8: #{_mlp_forward_impl.1} parent=1 // pred_region
      %s25 = ssub.s32 256, 256
      %26 = vsyncadd [#allocation5], %s25
      %s27 = sshll.u32 [#allocation4], 4
      %s28 = int_to_ptr.vmem [resolvable:$true] %s27
      %33 = dma.hbm_to_vmem [thread:$0]  %s1, 256, %s28, [#allocation5], 64, 64, 4
    $region9: #{_mlp_forward_impl.1} parent=1 // pred_fallthru
      _
    // Predicated region
    $region10: #{_mlp_forward_impl.1} parent=1 // pred_check
      _
    $region11: #{_mlp_forward_impl.1} parent=1 // pred_check_branch
      %35 = sbr.rel (0) target = $region13
    $region12: #{_mlp_forward_impl.1} parent=1 // pred_region
      _
    $region13: #{_mlp_forward_impl.1} parent=1 // pred_fallthru
      _
    // Predicated region
    $region14: #{_mlp_forward_impl.1} parent=1 // pred_check
      _
    $region15: #{_mlp_forward_impl.1} parent=1 // pred_check_branch
      %37 = sbr.rel (0) target = $region17
    $region16: #{_mlp_forward_impl.1} parent=1 // pred_region
      %s39 = ssub.s32 1024, 1024
      %40 = vsyncadd [#allocation5], %s39
      %s41 = sshll.u32 [#allocation6], 4
      %s42 = int_to_ptr.vmem [resolvable:$true] %s41
      %47 = dma.hbm_to_vmem [thread:$0]  %s3, 1024, %s42, [#allocation5], 64, 64, 4
    $region17: #{_mlp_forward_impl.1} parent=1 // pred_fallthru
      _
    // Predicated region
    $region18: #{_mlp_forward_impl.1} parent=1 // pred_check
      _
    $region19: #{_mlp_forward_impl.1} parent=1 // pred_check_branch
      %49 = sbr.rel (0) target = $region21
    $region20: #{_mlp_forward_impl.1} parent=1 // pred_region
      _
    $region21: #{_mlp_forward_impl.1} parent=1 // pred_fallthru
      _
    // Predicated region
    $region22: #{_mlp_forward_impl.1} parent=1 // pred_check
      _
    $region23: #{_mlp_forward_impl.1} parent=1 // pred_check_branch
      %51 = sbr.rel (0) target = $region25
    $region24: #{_mlp_forward_impl.1} parent=1 // pred_region
      %52 = dma.done [#allocation3], 128
    $region25: #{_mlp_forward_impl.1} parent=1 // pred_fallthru
      _
    // Predicated region
    $region26: #{_mlp_forward_impl.1} parent=1 // pred_check
      _
    $region27: #{_mlp_forward_impl.1} parent=1 // pred_check_branch
      %54 = sbr.rel (0) target = $region29
    $region28: #{_mlp_forward_impl.1} parent=1 // pred_region
      %55 = dma.done [#allocation5], 256
    $region29: #{_mlp_forward_impl.1} parent=1 // pred_fallthru
      _
    // Predicated region
    $region30: #{_mlp_forward_impl.1} parent=1 // pred_check
      _
    $region31: #{_mlp_forward_impl.1} parent=1 // pred_check_branch
      %57 = sbr.rel (0) target = $region33
    $region32: #{_mlp_forward_impl.1} parent=1 // pred_region
      %58 = dma.done [#allocation5], 1024
    $region33: #{_mlp_forward_impl.1} parent=1 // pred_fallthru
      _
    %v60 = vld [vmem:[#allocation2] sm:$0xff]
    %v61 = vpack.c.bf16 %v60, %v60
    %v62 = vld [vmem:[#allocation4] sm:$0xf]
    %v63 = vld [vmem:[#allocation4 + $0x4] sm:$0xf]
    %v64 = vld [vmem:[#allocation4 + $0x8] sm:$0xf]
    %v65 = vld [vmem:[#allocation4 + $0xc] sm:$0xf]
    %v66 = vld [vmem:[%s2] sm:$0x1]
    %v68 = vlaneseq
    %v69 = vshrl.u32 %v68, 7
    %v70 = vsub.s32 0, %v69
    %v71 = vrot.slane %v66, %v70
    %v77 = vunpack.c.l.b16 %v62
    %v78 = vunpack.c.l.b16 %v63
    %v79 = vunpack.c.l.b16 %v64
    %v80 = vunpack.c.l.b16 %v65
    %v81 = vpack.c.b16 %v78, %v77
    %v82 = vpack.c.b16 %v80, %v79
    %vm85 = vcmask 261120
    %v87 = vsel %vm85, %v61, 0
    %89 = vmatprep.subr.bf16.mxu0 0
    %90 = vmatpush1.bf16.msra.mxu0 %v81
    %91 = vmatprep.subr.bf16.mxu0 0
    %92 = vmatpush1.bf16.msra.mxu0 %v82
    %93 = vmatprep.subr.bf16.mxu0 0
    %94 = vmatpush1.bf16.msra.mxu0 0
    %95 = vmatprep.subr.bf16.mxu0 0
    %96 = vmatpush1.bf16.msra.mxu0 0
    %97 = vmatprep.subr.bf16.mxu0 0
    %98 = vmatpush1.bf16.msra.mxu0 0
    %99 = vmatprep.subr.bf16.mxu0 0
    %100 = vmatpush1.bf16.msra.mxu0 0
    %101 = vmatprep.subr.bf16.mxu0 0
    %102 = vmatpush1.bf16.msra.mxu0 0
    %103 = vmatprep.subr.bf16.mxu0 0
    %104 = vmatpush1.bf16.msra.mxu0 0
    %105 = vmatprep.subr.bf16.mxu0 0
    %106 = vmatpush1.bf16.msra.mxu0 0
    %107 = vmatprep.subr.bf16.mxu0 0
    %108 = vmatpush1.bf16.msra.mxu0 0
    %109 = vmatprep.subr.bf16.mxu0 0
    %110 = vmatpush1.bf16.msra.mxu0 0
    %111 = vmatprep.subr.bf16.mxu0 0
    %112 = vmatpush1.bf16.msra.mxu0 0
    %113 = vmatprep.subr.bf16.mxu0 0
    %114 = vmatpush1.bf16.msra.mxu0 0
    %115 = vmatprep.subr.bf16.mxu0 0
    %116 = vmatpush1.bf16.msra.mxu0 0
    %117 = vmatprep.subr.bf16.mxu0 0
    %118 = vmatpush1.bf16.msra.mxu0 0
    %119 = vmatprep.subr.bf16.mxu0 0
    %120 = vmatpush1.bf16.msra.mxu0 0
    %121 = vmatprep.mubr.bf16.mxu0 0
    %122 = vmatmul.mubr.bf16.gmra.mrb[0].mxu0 %v87
    %v123 = vpop.f32.mrb[0].mxu0
    %v124 = vadd.f32 %v71, %v123
    %v125 = vpop.f32.mrb[0].mxu0
    %v126 = vpop.f32.mrb[0].mxu0
    %v127 = vpop.f32.mrb[0].mxu0
    %128 = vdwg.mxu0
    %v129 = vmax.f32 %v124, 0.0
    %v130 = vpack.c.bf16 %v129, %v129
    %v131 = vld [vmem:[#allocation6] sm:$0xf]
    %v132 = vld [vmem:[#allocation6 + $0x4] sm:$0xf]
    %v133 = vld [vmem:[#allocation6 + $0x8] sm:$0xf]
    %v134 = vld [vmem:[#allocation6 + $0xc] sm:$0xf]
    %v135 = vld [vmem:[#allocation6 + $0x10] sm:$0xf]
    %v136 = vld [vmem:[#allocation6 + $0x14] sm:$0xf]
    %v137 = vld [vmem:[#allocation6 + $0x18] sm:$0xf]
    %v138 = vld [vmem:[#allocation6 + $0x1c] sm:$0xf]
    %v139 = vld [vmem:[#allocation6 + $0x20] sm:$0xf]
    %v140 = vld [vmem:[#allocation6 + $0x24] sm:$0xf]
    %v141 = vld [vmem:[#allocation6 + $0x28] sm:$0xf]
    %v142 = vld [vmem:[#allocation6 + $0x2c] sm:$0xf]
    %v143 = vld [vmem:[#allocation6 + $0x30] sm:$0xf]
    %v144 = vld [vmem:[#allocation6 + $0x34] sm:$0xf]
    %v145 = vld [vmem:[#allocation6 + $0x38] sm:$0xf]
    %v146 = vld [vmem:[#allocation6 + $0x3c] sm:$0xf]
    %v147 = vld [vmem:[%s4] sm:$0x1]
    %v149 = vlaneseq
    %v150 = vshrl.u32 %v149, 7
    %v151 = vsub.s32 0, %v150
    %v152 = vrot.slane %v147, %v151
    %v170 = vunpack.c.l.b16 %v131
    %v171 = vunpack.c.l.b16 %v132
    %v172 = vunpack.c.l.b16 %v133
    %v173 = vunpack.c.l.b16 %v134
    %v174 = vunpack.c.l.b16 %v135
    %v175 = vunpack.c.l.b16 %v136
    %v176 = vunpack.c.l.b16 %v137
    %v177 = vunpack.c.l.b16 %v138
    %v178 = vunpack.c.l.b16 %v139
    %v179 = vunpack.c.l.b16 %v140
    %v180 = vunpack.c.l.b16 %v141
    %v181 = vunpack.c.l.b16 %v142
    %v182 = vunpack.c.l.b16 %v143
    %v183 = vunpack.c.l.b16 %v144
    %v184 = vunpack.c.l.b16 %v145
    %v185 = vunpack.c.l.b16 %v146
    %v186 = vpack.c.b16 %v171, %v170
    %v187 = vpack.c.b16 %v173, %v172
    %v188 = vpack.c.b16 %v175, %v174
    %v189 = vpack.c.b16 %v177, %v176
    %v190 = vpack.c.b16 %v179, %v178
    %v191 = vpack.c.b16 %v181, %v180
    %v192 = vpack.c.b16 %v183, %v182
    %v193 = vpack.c.b16 %v185, %v184
    %202 = vmatprep.subr.bf16.mxu0 0
    %203 = vmatpush1.bf16.msra.mxu0 %v186
    %204 = vmatprep.subr.bf16.mxu0 0
    %205 = vmatpush1.bf16.msra.mxu0 %v187
    %206 = vmatprep.subr.bf16.mxu0 0
    %207 = vmatpush1.bf16.msra.mxu0 %v188
    %208 = vmatprep.subr.bf16.mxu0 0
    %209 = vmatpush1.bf16.msra.mxu0 %v189
    %210 = vmatprep.subr.bf16.mxu0 0
    %211 = vmatpush1.bf16.msra.mxu0 %v190
    %212 = vmatprep.subr.bf16.mxu0 0
    %213 = vmatpush1.bf16.msra.mxu0 %v191
    %214 = vmatprep.subr.bf16.mxu0 0
    %215 = vmatpush1.bf16.msra.mxu0 %v192
    %216 = vmatprep.subr.bf16.mxu0 0
    %217 = vmatpush1.bf16.msra.mxu0 %v193
    %218 = vmatprep.subr.bf16.mxu0 0
    %219 = vmatpush1.bf16.msra.mxu0 0
    %220 = vmatprep.subr.bf16.mxu0 0
    %221 = vmatpush1.bf16.msra.mxu0 0
    %222 = vmatprep.subr.bf16.mxu0 0
    %223 = vmatpush1.bf16.msra.mxu0 0
    %224 = vmatprep.subr.bf16.mxu0 0
    %225 = vmatpush1.bf16.msra.mxu0 0
    %226 = vmatprep.subr.bf16.mxu0 0
    %227 = vmatpush1.bf16.msra.mxu0 0
    %228 = vmatprep.subr.bf16.mxu0 0
    %229 = vmatpush1.bf16.msra.mxu0 0
    %230 = vmatprep.subr.bf16.mxu0 0
    %231 = vmatpush1.bf16.msra.mxu0 0
    %232 = vmatprep.subr.bf16.mxu0 0
    %233 = vmatpush1.bf16.msra.mxu0 0
    %234 = vmatprep.mubr.bf16.mxu0 0
    %235 = vmatmul.mubr.bf16.gmra.mrb[0].mxu0 %v130
    %v236 = vpop.f32.mrb[0].mxu0
    %v237 = vadd.f32 %v152, %v236
    %v238 = vpop.f32.mrb[0].mxu0
    %v239 = vpop.f32.mrb[0].mxu0
    %v240 = vpop.f32.mrb[0].mxu0
    %241 = vdwg.mxu0
    %v242 = vpack.c.bf16 %v237, %v237
    %243 = vst [vmem:[%s5] sm:$0xf] %v242
    // Predicated region
    $region34: #{_mlp_forward_impl.1} parent=1 // pred_check
      _
    $region35: #{_mlp_forward_impl.1} parent=1 // pred_check_branch
      %245 = sbr.rel (0) target = $region37
    $region36: #{_mlp_forward_impl.1} parent=1 // pred_region
      _
    $region37: #{_mlp_forward_impl.1} parent=1 // pred_fallthru
      _
    // Predicated region
    $region38: #{_mlp_forward_impl.1} parent=1 // pred_check
      _
    $region39: #{_mlp_forward_impl.1} parent=1 // pred_check_branch
      %247 = sbr.rel (0) target = $region41
    $region40: #{_mlp_forward_impl.1} parent=1 // pred_region
      _
    $region41: #{_mlp_forward_impl.1} parent=1 // pred_fallthru
      _
    %248 = vsyncpa [#allocation3], 1
    %249 = vsyncpa [#allocation5], 1

</llo_original>
